<compile_context>
chip_gen: v7x
topology: tpu7x:2x2x1
jax: 0.10.0
libtpu: 0.0.40
codegen_flags: <defaults>
</compile_context>

<pallas_src>
import jax
import jax.numpy as jnp
from jax.experimental import pallas as pl
from jax.experimental.pallas import tpu as pltpu


def pgmodel_kernel(x_ref, w1_ref, b1_ref, w2_ref, b2_ref, out_ref):
    x = x_ref[...].astype(jnp.bfloat16)   # (TB, D_in) -> bf16 for the MXU
    w1 = w1_ref[...]                      # (D_in, H)  bf16 (pre-cast in wrapper)
    b1 = b1_ref[...]                      # (1, H)     f32
    w2 = w2_ref[...]                      # (H, A)     bf16 (pre-cast in wrapper)
    b2 = b2_ref[...]                      # (1, A)     f32

    # fc1 on the MXU (idle unit in this kernel): bf16 operands, f32 accumulate.
    h = jnp.dot(x, w1, preferred_element_type=jnp.float32) + b1

    # Dropout == identity in eval mode; ReLU + bf16 cast fused into one
    # expression so only a single (TB, H) intermediate is live (v5e vst slot).
    h = jnp.maximum(h, 0.0).astype(jnp.bfloat16)

    # fc2: MXU matmul, bf16 operands, f32 accumulation; bias add in f32.
    logits = jnp.dot(h, w2, preferred_element_type=jnp.float32) + b2

    num_actions = logits.shape[1]
    if num_actions == 2:
        # Two-class softmax == sigmoid of the logit difference. Exactly
        # normalized, numerically stable, no lane reductions, one EUP exp/row.
        d = logits[:, 1:2] - logits[:, 0:1]
        p1 = 1.0 / (1.0 + jnp.exp(-d))
        out_ref[...] = jnp.concatenate([1.0 - p1, p1], axis=1).astype(out_ref.dtype)
    else:
        # Generic numerically stable softmax, exact normalization.
        m = jnp.max(logits, axis=1, keepdims=True)
        e = jnp.exp(logits - m)
        out_ref[...] = (e / jnp.sum(e, axis=1, keepdims=True)).astype(out_ref.dtype)


def _round_up(v, m):
    return ((v + m - 1) // m) * m


def pgmodel_forward(x, w1, b1, w2, b2, *, block_b=512):
    """x: (B, D_in) f32. Returns softmax action probabilities (B, A) f32."""
    B, D_in = x.shape
    H, A = w2.shape

    # Batch tile. Aim for >= 2 grid steps when B >= 16 so both v7x TensorCores
    # get work; keep TB a multiple of 8 (sublane constraint) unless TB == B.
    if B <= 8:
        TB = B
    else:
        TB = min(block_b, _round_up(pl.cdiv(B, 2), 8))
    grid = (pl.cdiv(B, TB),)

    # Hoist weight bf16 casts out of the kernel (done once per call, not per
    # grid step; halves resident weight VMEM + HBM DMA).
    w1_bf16 = w1.astype(jnp.bfloat16)
    w2_bf16 = w2.astype(jnp.bfloat16)

    flops = 2 * B * (D_in * H + H * A)
    transcendentals = B if A == 2 else B * A
    bytes_accessed = (4 * x.size + 2 * w1.size + 4 * b1.size
                      + 2 * w2.size + 4 * b2.size + 4 * B * A)

    return pl.pallas_call(
        pgmodel_kernel,
        out_shape=jax.ShapeDtypeStruct((B, A), jnp.float32),
        grid=grid,
        in_specs=[
            pl.BlockSpec((TB, D_in), lambda i: (i, 0)),   # x: tiled over batch
            pl.BlockSpec((D_in, H), lambda i: (0, 0)),    # w1 (bf16): resident
            pl.BlockSpec((1, H), lambda i: (0, 0)),       # b1: resident
            pl.BlockSpec((H, A), lambda i: (0, 0)),       # w2 (bf16): resident
            pl.BlockSpec((1, A), lambda i: (0, 0)),       # b2: resident
        ],
        out_specs=pl.BlockSpec((TB, A), lambda i: (i, 0)),
        compiler_params=pltpu.CompilerParams(
            dimension_semantics=("parallel",)),           # v7x dual-TC sharding
        cost_estimate=pl.CostEstimate(
            flops=flops, transcendentals=transcendentals,
            bytes_accessed=bytes_accessed),
    )(x, w1_bf16, b1, w2_bf16, b2)


def init_params(key, input_size, hidden_size, num_actions):
    """Deterministic init mimicking torch.nn.Linear default:
    U(-1/sqrt(fan_in), 1/sqrt(fan_in)) for both weight and bias. Weights are
    stored transposed relative to torch (as (in, out)) so the kernel computes
    plain x @ W."""
    k1, k2, k3, k4 = jax.random.split(key, 4)
    bound1 = 1.0 / jnp.sqrt(float(input_size))
    bound2 = 1.0 / jnp.sqrt(float(hidden_size))
    w1 = jax.random.uniform(k1, (input_size, hidden_size), jnp.float32,
                            -bound1, bound1)
    b1 = jax.random.uniform(k2, (1, hidden_size), jnp.float32, -bound1, bound1)
    w2 = jax.random.uniform(k3, (hidden_size, num_actions), jnp.float32,
                            -bound2, bound2)
    b2 = jax.random.uniform(k4, (1, num_actions), jnp.float32, -bound2, bound2)
    return w1, b1, w2, b2


if __name__ == "__main__":
    # Gym-style env: e.g. CartPole -> observation dim 4, 2 actions.
    input_size = 4
    hidden_size = 128
    num_actions = 2
    batch = 8

    key = jax.random.PRNGKey(0)
    kx, kp = jax.random.split(key)
    x = jax.random.normal(kx, (batch, input_size), jnp.float32)
    w1, b1, w2, b2 = init_params(kp, input_size, hidden_size, num_actions)

    probs = jax.block_until_ready(pgmodel_forward(x, w1, b1, w2, b2))
    assert probs.shape == (batch, num_actions)

    # Reference with matching numerics (bf16 MXU operands, f32 accumulation).
    h_ref = jnp.maximum(
        jnp.dot(x.astype(jnp.bfloat16), w1.astype(jnp.bfloat16),
                preferred_element_type=jnp.float32) + b1, 0.0)
    logits_ref = jnp.dot(h_ref.astype(jnp.bfloat16), w2.astype(jnp.bfloat16),
                         preferred_element_type=jnp.float32) + b2
    ref_probs = jax.nn.softmax(logits_ref, axis=1)

    # Exact normalization (sigmoid form) -> rows sum to 1 to fp rounding.
    assert bool(jnp.allclose(jnp.sum(probs, axis=1), 1.0, atol=1e-5))
    assert bool(jnp.allclose(probs, ref_probs, atol=2e-3))

    # Coarse sanity against the pure-f32 PyTorch-equivalent reference.
    ref_probs_f32 = jax.nn.softmax(jnp.maximum(x @ w1 + b1, 0.0) @ w2 + b2, axis=1)
    assert bool(jnp.allclose(probs, ref_probs_f32, atol=3e-2))

    print("KERNEL_OK")
</pallas_src>

<mosaic_0001>
module attributes {stable_mosaic.version = 11 : i64} {
  func.func @pgmodel_kernel(%arg0: i32, %arg1: memref<8x4xf32, #tpu.memory_space<vmem>>, %arg2: memref<4x128xbf16, #tpu.memory_space<vmem>>, %arg3: memref<1x128xf32, #tpu.memory_space<vmem>>, %arg4: memref<128x2xbf16, #tpu.memory_space<vmem>>, %arg5: memref<1x2xf32, #tpu.memory_space<vmem>>, %arg6: memref<8x2xf32, #tpu.memory_space<vmem>>) attributes {dimension_semantics = [#tpu.dimension_semantics<parallel>], iteration_bounds = array<i64: 1>, scalar_prefetch = 0 : i64, scratch_operands = 0 : i64, tpu.core_type = #tpu.core_type<tc>, window_params = [{transform_indices = @transform_0, window_bounds = array<i64: 8, 4>}, {pipeline_mode = #tpu.pipeline_mode<synchronous>, transform_indices = @transform_1, window_bounds = array<i64: 4, 128>}, {pipeline_mode = #tpu.pipeline_mode<synchronous>, transform_indices = @transform_2, window_bounds = array<i64: 1, 128>}, {pipeline_mode = #tpu.pipeline_mode<synchronous>, transform_indices = @transform_3, window_bounds = array<i64: 128, 2>}, {pipeline_mode = #tpu.pipeline_mode<synchronous>, transform_indices = @transform_4, window_bounds = array<i64: 1, 2>}, {transform_indices = @transform_5, window_bounds = array<i64: 8, 2>}]} {
    %c0 = arith.constant 0 : index
    %c0_0 = arith.constant 0 : index
    %0 = vector.load %arg1[%c0, %c0_0] : memref<8x4xf32, #tpu.memory_space<vmem>>, vector<8x4xf32>
    %1 = arith.truncf %0 : vector<8x4xf32> to vector<8x4xbf16>
    %c0_1 = arith.constant 0 : index
    %c0_2 = arith.constant 0 : index
    %2 = vector.load %arg2[%c0_1, %c0_2] : memref<4x128xbf16, #tpu.memory_space<vmem>>, vector<4x128xbf16>
    %c0_3 = arith.constant 0 : index
    %c0_4 = arith.constant 0 : index
    %3 = vector.load %arg3[%c0_3, %c0_4] : memref<1x128xf32, #tpu.memory_space<vmem>>, vector<1x128xf32>
    %c0_5 = arith.constant 0 : index
    %c0_6 = arith.constant 0 : index
    %4 = vector.load %arg4[%c0_5, %c0_6] : memref<128x2xbf16, #tpu.memory_space<vmem>>, vector<128x2xbf16>
    %c0_7 = arith.constant 0 : index
    %c0_8 = arith.constant 0 : index
    %5 = vector.load %arg5[%c0_7, %c0_8] : memref<1x2xf32, #tpu.memory_space<vmem>>, vector<1x2xf32>
    %cst = arith.constant dense<0.000000e+00> : vector<8x128xf32>
    %6 = tpu.matmul %1, %2, %cst {dimension_numbers = #tpu.dot_dimension_numbers<[1], [0], [0], [1], [0, 0, 1, 1], [], []>} : vector<8x4xbf16>, vector<4x128xbf16>, vector<8x128xf32> -> vector<8x128xf32>
    %7 = vector.broadcast %3 : vector<1x128xf32> to vector<8x128xf32>
    %8 = arith.addf %6, %7 : vector<8x128xf32>
    %cst_9 = arith.constant 0.000000e+00 : f32
    %9 = vector.broadcast %cst_9 : f32 to vector<8x128xf32>
    %10 = arith.maximumf %8, %9 : vector<8x128xf32>
    %11 = arith.truncf %10 : vector<8x128xf32> to vector<8x128xbf16>
    %cst_10 = arith.constant dense<0.000000e+00> : vector<8x2xf32>
    %12 = tpu.matmul %11, %4, %cst_10 {dimension_numbers = #tpu.dot_dimension_numbers<[1], [0], [0], [1], [0, 0, 1, 1], [], []>} : vector<8x128xbf16>, vector<128x2xbf16>, vector<8x2xf32> -> vector<8x2xf32>
    %13 = vector.broadcast %5 : vector<1x2xf32> to vector<8x2xf32>
    %14 = arith.addf %12, %13 : vector<8x2xf32>
    %15 = vector.extract_strided_slice %14 {offsets = [0, 1], sizes = [8, 1], strides = [1, 1]} : vector<8x2xf32> to vector<8x1xf32>
    %16 = vector.extract_strided_slice %14 {offsets = [0, 0], sizes = [8, 1], strides = [1, 1]} : vector<8x2xf32> to vector<8x1xf32>
    %17 = arith.subf %15, %16 : vector<8x1xf32>
    %cst_11 = arith.constant 0.000000e+00 : f32
    %18 = vector.broadcast %cst_11 : f32 to vector<8x1xf32>
    %19 = arith.subf %18, %17 : vector<8x1xf32>
    %20 = math.exp %19 : vector<8x1xf32>
    %cst_12 = arith.constant 1.000000e+00 : f32
    %21 = vector.broadcast %cst_12 : f32 to vector<8x1xf32>
    %22 = arith.addf %21, %20 : vector<8x1xf32>
    %cst_13 = arith.constant 1.000000e+00 : f32
    %23 = vector.broadcast %cst_13 : f32 to vector<8x1xf32>
    %24 = arith.divf %23, %22 : vector<8x1xf32>
    %cst_14 = arith.constant 1.000000e+00 : f32
    %25 = vector.broadcast %cst_14 : f32 to vector<8x1xf32>
    %26 = arith.subf %25, %24 : vector<8x1xf32>
    %27 = tpu.concatenate %26, %24 in 1 : vector<8x1xf32>, vector<8x1xf32> -> vector<8x2xf32>
    %c0_15 = arith.constant 0 : index
    %c0_16 = arith.constant 0 : index
    %28 = vector.load %arg6[%c0_15, %c0_16] : memref<8x2xf32, #tpu.memory_space<vmem>>, vector<8x2xf32>
    tpu.vector_store %arg6[%c0_15, %c0_16], %27 {strides = array<i32>} : memref<8x2xf32, #tpu.memory_space<vmem>>, vector<8x2xf32>,
    return
  }
  func.func @transform_0(%arg0: i32) -> (i32, i32) {
    %c0_i32 = arith.constant 0 : i32
    %c0_i32_0 = arith.constant 0 : i32
    return %arg0, %c0_i32 : i32, i32
  }
  func.func @transform_1(%arg0: i32) -> (i32, i32) {
    %c0_i32 = arith.constant 0 : i32
    %c0_i32_0 = arith.constant 0 : i32
    %c0_i32_1 = arith.constant 0 : i32
    return %c0_i32, %c0_i32_0 : i32, i32
  }
  func.func @transform_2(%arg0: i32) -> (i32, i32) {
    %c0_i32 = arith.constant 0 : i32
    %c0_i32_0 = arith.constant 0 : i32
    %c0_i32_1 = arith.constant 0 : i32
    return %c0_i32, %c0_i32_0 : i32, i32
  }
  func.func @transform_3(%arg0: i32) -> (i32, i32) {
    %c0_i32 = arith.constant 0 : i32
    %c0_i32_0 = arith.constant 0 : i32
    %c0_i32_1 = arith.constant 0 : i32
    return %c0_i32, %c0_i32_0 : i32, i32
  }
  func.func @transform_4(%arg0: i32) -> (i32, i32) {
    %c0_i32 = arith.constant 0 : i32
    %c0_i32_0 = arith.constant 0 : i32
    %c0_i32_1 = arith.constant 0 : i32
    return %c0_i32, %c0_i32_0 : i32, i32
  }
  func.func @transform_5(%arg0: i32) -> (i32, i32) {
    %c0_i32 = arith.constant 0 : i32
    %c0_i32_0 = arith.constant 0 : i32
    return %arg0, %c0_i32 : i32, i32
  }
}

</mosaic_0001>

<llo_original>
// kernel: tpu_custom_call.1
$region0: #{tpu_custom_call.1}
  #allocation0 [shape = 'u32[]', space=smem, size = 0x4, offset = 0x4, fixed_abs, tag = 'smem constant byte address 0x4 - core index']
  #allocation1 [shape = 'u32[144,128]{1,0:T(1,128)}', space=vmem, size = 0x12000, scoped, tag = 'internal scratch']
  %s0 = inlined_call_operand.vmem [shape: f32[8,4], index: 0, kind: input, shape index: {}]
  %s1 = inlined_call_operand.vmem [shape: bf16[4,128], index: 1, kind: input, shape index: {}]
  %s2 = inlined_call_operand.vmem [shape: f32[1,128], index: 2, kind: input, shape index: {}]
  %s3 = inlined_call_operand.vmem [shape: bf16[128,2], index: 3, kind: input, shape index: {}]
  %s4 = inlined_call_operand.vmem [shape: f32[1,2], index: 4, kind: input, shape index: {}]
  %s5 = inlined_call_operand.vmem [shape: f32[8,2], index: 5, kind: output, shape index: {}]
  %s6 = sld [smem:[#allocation0]]
  $region30: #{tpu_custom_call.1} parent=0
    _
  %s8 = ssub.s32 1, %s6
  %s9 = scalar_select 0, %s8, %s6
  // Predicated region
  $region2: #{tpu_custom_call.1} parent=0 // pred_check
    _
  $region3: #{tpu_custom_call.1} parent=0 // pred_check_branch
    %11 = sbr.rel (0) target = $region5
  $region4: #{tpu_custom_call.1} parent=0 // pred_region
    _
  $region5: #{tpu_custom_call.1} parent=0 // pred_fallthru
    _
  // Predicated region
  $region6: #{tpu_custom_call.1} parent=0 // pred_check
    _
  $region7: #{tpu_custom_call.1} parent=0 // pred_check_branch
    %13 = sbr.rel (0) target = $region9
  $region8: #{tpu_custom_call.1} parent=0 // pred_region
    _
  $region9: #{tpu_custom_call.1} parent=0 // pred_fallthru
    _
  // Predicated region
  $region10: #{tpu_custom_call.1} parent=0 // pred_check
    _
  $region11: #{tpu_custom_call.1} parent=0 // pred_check_branch
    %15 = sbr.rel (0) target = $region13
  $region12: #{tpu_custom_call.1} parent=0 // pred_region
    _
  $region13: #{tpu_custom_call.1} parent=0 // pred_fallthru
    _
  // Predicated region
  $region14: #{tpu_custom_call.1} parent=0 // pred_check
    _
  $region15: #{tpu_custom_call.1} parent=0 // pred_check_branch
    %17 = sbr.rel (0) target = $region17
  $region16: #{tpu_custom_call.1} parent=0 // pred_region
    _
  $region17: #{tpu_custom_call.1} parent=0 // pred_fallthru
    _
  // Predicated region
  $region18: #{tpu_custom_call.1} parent=0 // pred_check
    _
  $region19: #{tpu_custom_call.1} parent=0 // pred_check_branch
    %19 = sbr.rel (0) target = $region21
  $region20: #{tpu_custom_call.1} parent=0 // pred_region
    _
  $region21: #{tpu_custom_call.1} parent=0 // pred_fallthru
    _
  %v21 = vld [vmem:[%s0] sm:$0xff]
  %v22 = vpack.c.bf16 %v21, %v21
  %v23 = vld [vmem:[%s1] sm:$0x3]
  %v24 = vld [vmem:[%s2] sm:$0x1]
  %v25 = vld [vmem:[%s3] sm:$0xf]
  %v26 = vld [vmem:[%s3 + $0x4] sm:$0xf]
  %v27 = vld [vmem:[%s3 + $0x8] sm:$0xf]
  %v28 = vld [vmem:[%s3 + $0xc] sm:$0xf]
  %v29 = vld [vmem:[%s3 + $0x10] sm:$0xf]
  %v30 = vld [vmem:[%s3 + $0x14] sm:$0xf]
  %v31 = vld [vmem:[%s3 + $0x18] sm:$0xf]
  %v32 = vld [vmem:[%s3 + $0x1c] sm:$0xf]
  %v33 = vld [vmem:[%s3 + $0x20] sm:$0xf]
  %v34 = vld [vmem:[%s3 + $0x24] sm:$0xf]
  %v35 = vld [vmem:[%s3 + $0x28] sm:$0xf]
  %v36 = vld [vmem:[%s3 + $0x2c] sm:$0xf]
  %v37 = vld [vmem:[%s3 + $0x30] sm:$0xf]
  %v38 = vld [vmem:[%s3 + $0x34] sm:$0xf]
  %v39 = vld [vmem:[%s3 + $0x38] sm:$0xf]
  %v40 = vld [vmem:[%s3 + $0x3c] sm:$0xf]
  %v41 = vld [vmem:[%s4] sm:$0x1]
  %v43 = vlaneseq
  %v44 = vshrl.u32 %v43, 7
  %v45 = vsub.s32 0, %v44
  %v46 = vrot.slane %v24, %v45
  %vm48 = vcmask 31744
  %v50 = vsel %vm48, %v22, 0
  %vm52 = vcmask 1041408
  %v54 = vsel %vm52, %v23, 0
  %56 = vmatprep.subr.bf16.mxu0 0
  %57 = vmatpush1.bf16.msra.mxu0 %v54
  %58 = vmatprep.subr.bf16.mxu0 0
  %59 = vmatpush1.bf16.msra.mxu0 0
  %60 = vmatprep.subr.bf16.mxu0 0
  %61 = vmatpush1.bf16.msra.mxu0 0
  %62 = vmatprep.subr.bf16.mxu0 0
  %63 = vmatpush1.bf16.msra.mxu0 0
  %64 = vmatprep.subr.bf16.mxu0 0
  %65 = vmatpush1.bf16.msra.mxu0 0
  %66 = vmatprep.subr.bf16.mxu0 0
  %67 = vmatpush1.bf16.msra.mxu0 0
  %68 = vmatprep.subr.bf16.mxu0 0
  %69 = vmatpush1.bf16.msra.mxu0 0
  %70 = vmatprep.subr.bf16.mxu0 0
  %71 = vmatpush1.bf16.msra.mxu0 0
  %72 = vmatprep.subr.bf16.mxu0 0
  %73 = vmatpush1.bf16.msra.mxu0 0
  %74 = vmatprep.subr.bf16.mxu0 0
  %75 = vmatpush1.bf16.msra.mxu0 0
  %76 = vmatprep.subr.bf16.mxu0 0
  %77 = vmatpush1.bf16.msra.mxu0 0
  %78 = vmatprep.subr.bf16.mxu0 0
  %79 = vmatpush1.bf16.msra.mxu0 0
  %80 = vmatprep.subr.bf16.mxu0 0
  %81 = vmatpush1.bf16.msra.mxu0 0
  %82 = vmatprep.subr.bf16.mxu0 0
  %83 = vmatpush1.bf16.msra.mxu0 0
  %84 = vmatprep.subr.bf16.mxu0 0
  %85 = vmatpush1.bf16.msra.mxu0 0
  %86 = vmatprep.subr.bf16.mxu0 0
  %87 = vmatpush1.bf16.msra.mxu0 0
  %88 = vmatprep.mubr.bf16.mxu0 0
  %89 = vmatmul.mubr.bf16.gmra.mrb[0].mxu0 %v50
  %v90 = vpop.f32.mrb[0].mxu0
  %v91 = vadd.f32 %v46, %v90
  %v92 = vpop.f32.mrb[0].mxu0
  %v93 = vpop.f32.mrb[0].mxu0
  %v94 = vpop.f32.mrb[0].mxu0
  %95 = vdwg.mxu0
  %v96 = vmax.f32 %v91, 0.0
  %v97 = vpack.c.bf16 %v96, %v96
  %v99 = vlaneseq
  %v100 = vshrl.u32 %v99, 7
  %v101 = vsub.s32 0, %v100
  %v102 = vrot.slane %v41, %v101
  %v120 = vunpack.c.l.b16 %v25
  %v121 = vunpack.c.l.b16 %v26
  %v122 = vunpack.c.l.b16 %v27
  %v123 = vunpack.c.l.b16 %v28
  %v124 = vunpack.c.l.b16 %v29
  %v125 = vunpack.c.l.b16 %v30
  %v126 = vunpack.c.l.b16 %v31
  %v127 = vunpack.c.l.b16 %v32
  %v128 = vunpack.c.l.b16 %v33
  %v129 = vunpack.c.l.b16 %v34
  %v130 = vunpack.c.l.b16 %v35
  %v131 = vunpack.c.l.b16 %v36
  %v132 = vunpack.c.l.b16 %v37
  %v133 = vunpack.c.l.b16 %v38
  %v134 = vunpack.c.l.b16 %v39
  %v135 = vunpack.c.l.b16 %v40
  %v136 = vpack.c.b16 %v121, %v120
  %v137 = vpack.c.b16 %v123, %v122
  %v138 = vpack.c.b16 %v125, %v124
  %v139 = vpack.c.b16 %v127, %v126
  %v140 = vpack.c.b16 %v129, %v128
  %v141 = vpack.c.b16 %v131, %v130
  %v142 = vpack.c.b16 %v133, %v132
  %v143 = vpack.c.b16 %v135, %v134
  %152 = vmatprep.subr.bf16.mxu0 0
  %153 = vmatpush1.bf16.msra.mxu0 %v136
  %154 = vmatprep.subr.bf16.mxu0 0
  %155 = vmatpush1.bf16.msra.mxu0 %v137
  %156 = vmatprep.subr.bf16.mxu0 0
  %157 = vmatpush1.bf16.msra.mxu0 %v138
  %158 = vmatprep.subr.bf16.mxu0 0
  %159 = vmatpush1.bf16.msra.mxu0 %v139
  %160 = vmatprep.subr.bf16.mxu0 0
  %161 = vmatpush1.bf16.msra.mxu0 %v140
  %162 = vmatprep.subr.bf16.mxu0 0
  %163 = vmatpush1.bf16.msra.mxu0 %v141
  %164 = vmatprep.subr.bf16.mxu0 0
  %165 = vmatpush1.bf16.msra.mxu0 %v142
  %166 = vmatprep.subr.bf16.mxu0 0
  %167 = vmatpush1.bf16.msra.mxu0 %v143
  %168 = vmatprep.subr.bf16.mxu0 0
  %169 = vmatpush1.bf16.msra.mxu0 0
  %170 = vmatprep.subr.bf16.mxu0 0
  %171 = vmatpush1.bf16.msra.mxu0 0
  %172 = vmatprep.subr.bf16.mxu0 0
  %173 = vmatpush1.bf16.msra.mxu0 0
  %174 = vmatprep.subr.bf16.mxu0 0
  %175 = vmatpush1.bf16.msra.mxu0 0
  %176 = vmatprep.subr.bf16.mxu0 0
  %177 = vmatpush1.bf16.msra.mxu0 0
  %178 = vmatprep.subr.bf16.mxu0 0
  %179 = vmatpush1.bf16.msra.mxu0 0
  %180 = vmatprep.subr.bf16.mxu0 0
  %181 = vmatpush1.bf16.msra.mxu0 0
  %182 = vmatprep.subr.bf16.mxu0 0
  %183 = vmatpush1.bf16.msra.mxu0 0
  %184 = vmatprep.mubr.bf16.mxu0 0
  %185 = vmatmul.mubr.bf16.gmra.mrb[0].mxu0 %v97
  %v186 = vpop.f32.mrb[0].mxu0
  %v187 = vadd.f32 %v102, %v186
  %v188 = vpop.f32.mrb[0].mxu0
  %v189 = vpop.f32.mrb[0].mxu0
  %v190 = vpop.f32.mrb[0].mxu0
  %191 = vdwg.mxu0
  %193 = vrot.lane.b32.xlu0 %v187, 1
  %v194 = vpop.permute.xlu0 %193
  %v196 = vsub.f32 %v187, %v194
  %v197 = vsub.f32 0.0, %v196
  %v198 = vmul.f32 %v197, 1.442695
  %v199 = vpow.pop %v198
  %v200 = vadd.f32 %v199, 1.0
  %v201 = vrcp.pop %v200
  %v202 = vmul.f32 1.0, %v201
  %v203 = vsub.f32 1.0, %v202
  %205 = vrot.lane.b32.xlu0 %v203, 127
  %v206 = vpop.permute.xlu0 %205
  %vm208 = vcmask 7168
  %v209 = vsel %vm208, %v206, %v202
  %vm210 = vcmask 15360
  %211 = vst.msk [vmem:[%s5] sm:$0xff] %vm210, %v209
  // Predicated region
  $region22: #{tpu_custom_call.1} parent=0 // pred_check
    _
  $region23: #{tpu_custom_call.1} parent=0 // pred_check_branch
    %213 = sbr.rel (0) target = $region25
  $region24: #{tpu_custom_call.1} parent=0 // pred_region
    _
  $region25: #{tpu_custom_call.1} parent=0 // pred_fallthru
    _
  // Predicated region
  $region26: #{tpu_custom_call.1} parent=0 // pred_check
    _
  $region27: #{tpu_custom_call.1} parent=0 // pred_check_branch
    %215 = sbr.rel (0) target = $region29
  $region28: #{tpu_custom_call.1} parent=0 // pred_region
    _
  $region29: #{tpu_custom_call.1} parent=0 // pred_fallthru
    _

</llo_original>
